<compile_context>
chip_gen: v7x
topology: tpu7x:2x2x1
jax: 0.10.0
libtpu: 0.0.40
codegen_flags: <defaults>
</compile_context>

<pallas_src>
import jax
import jax.numpy as jnp
from jax.experimental import pallas as pl
from jax.experimental.pallas import tpu as pltpu


def _divisor_tiles(n, candidates):
    """Candidates that evenly divide n (descending), else just the full extent."""
    opts = [c for c in candidates if c <= n and n % c == 0]
    return opts or [n]


def _pick_tiles(B, D, budget_bytes=40 * 1024 * 1024):
    """Choose (tm, tk, p_resident, est_vmem_bytes).

    tm = q-row tile (lane width of the labels / output blocks); tk = tile of
    the distribution axis.  Prefers the largest tiles whose double-buffered
    working set stays under `budget_bytes` (safe on v7x's 64 MiB VMEM).  p is
    kept VMEM-resident in bf16 when small enough, otherwise streamed per
    k-chunk (and re-fetched once per i-tile).
    """
    p_resident = B * D * 2 * 2 <= 16 * 1024 * 1024   # bf16, incl. buffer headroom

    def estimate(tm, tk, resident):
        p_cost = B * D * 2 * 2 if resident else B * tk * 2 * 2
        return (2 * tk * tm * 4 * 2      # q^T and p^T f32 tiles, double-buffered
                + p_cost                 # p (bf16)
                + B * tm * 2 * 2         # labels^T (bf16), double-buffered
                + B * tm * 4             # cross^T f32 accumulator (scratch)
                + 6 * tm * 4)            # diag acc + pos/neg base + out (small)

    tm_opts = _divisor_tiles(B, (512, 256, 128))
    tk_opts = _divisor_tiles(D, (512, 256, 128))
    for tm in tm_opts:
        for tk in tk_opts:
            est = estimate(tm, tk, p_resident)
            if est <= budget_bytes:
                return tm, tk, p_resident, est
    tm, tk = tm_opts[-1], tk_opts[-1]
    return tm, tk, False, estimate(tm, tk, False)


def distribution_loss_with_label_v2(q, p, labels_matrix):
    """q, p: [B, D] row-wise probability distributions; labels_matrix: [B, B]."""
    q = q.astype(jnp.float32)
    p = p.astype(jnp.float32)
    labels_matrix = labels_matrix.astype(jnp.float32)
    B, D = q.shape

    tm, tk, p_resident, est_vmem = _pick_tiles(B, D)
    num_i = B // tm
    num_k = D // tk

    # ---- Wrapper-side hoists (cheap, f32, done once) -------------------------
    # h[j]  = sum_k p[j,k] log p[j,k]          (entropy term)
    # hL[i] = sum_j L[i,j] h[j],  H = sum_j h[j]
    # Folded into two per-row base vectors so the kernel finalize only needs
    # reductions of its own cross^T accumulator:
    #   positive*D = pos_base[r] - diag[r] - sum_j L[r,j] cross[j,r]
    #   negative*D = neg_base[r] - sum_j cross[j,r] + sum_j L[r,j] cross[j,r]
    # (the common 1/D factor cancels in positive/negative).
    h = jnp.sum(p * jnp.log(p), axis=1)                    # (B,)
    hL = labels_matrix @ h                                 # (B,)
    H = jnp.sum(h)
    pos_base = (h + hL)[None, :]                           # (1, B) f32
    neg_base = (H - hL)[None, :]                           # (1, B) f32

    # Layout plumbing (one-time XLA transposes / casts):
    q_t = jnp.transpose(q)                                 # (D, B) f32: natural (K, N) MXU rhs
    p_bf = p.astype(jnp.bfloat16)                          # (B, D) bf16: pure MXU lhs operand
    p_t = jnp.transpose(p)                                 # (D, B) f32: f32 self-KL (diag) path
    lbl_t = jnp.transpose(labels_matrix).astype(jnp.bfloat16)   # (B, B), 0/1 exact in bf16

    def kernel(qT_ref, p_ref, pT_ref, lblT_ref, posb_ref, negb_ref,
               out_ref, cross_acc, diag_acc):
        k = pl.program_id(1)
        nk = pl.num_programs(1)

        @pl.when(k == 0)
        def _init():
            cross_acc[...] = jnp.zeros_like(cross_acc)
            diag_acc[...] = jnp.zeros_like(diag_acc)

        # log q for this tile, (tk, tm) f32 -- the only transcendental left
        # in the kernel (B*D logs total over the whole grid).
        log_qT = jnp.log(qT_ref[...])

        if p_resident and num_k > 1:
            off = pl.multiple_of(k * tk, tk)               # 128-aligned lane offset
            p_chunk = p_ref[:, pl.ds(off, tk)]             # (B, tk) bf16, VMEM slice
        else:
            p_chunk = p_ref[...]                           # (B, tk) bf16

        # cross^T[j, r] += sum_k p[j, k] * log q[r_g, k]
        # Natural (M,K)x(K,N) bf16 MXU matmul with f32 accumulation.
        cross_acc[...] += jnp.dot(p_chunk, log_qT.astype(jnp.bfloat16),
                                  preferred_element_type=jnp.float32)

        # Self-KL diagonal accumulated in f32 on the VPU so the
        # h[r] - cross[r, r] cancellation isn't polluted by bf16 rounding.
        # pT block is exactly the current i-tile's p rows, transposed.
        diag_acc[...] += jnp.sum(pT_ref[...] * log_qT, axis=0, keepdims=True)

        @pl.when(k == nk - 1)
        def _finalize():
            lblT = lblT_ref[...].astype(jnp.float32)                   # (B, tm)
            cross = cross_acc[...]                                     # (B, tm)
            col_sum = jnp.sum(cross, axis=0, keepdims=True)            # (1, tm)
            pos_cross = jnp.sum(cross * lblT, axis=0, keepdims=True)   # (1, tm)
            positive = posb_ref[...] - diag_acc[...] - pos_cross
            negative = negb_ref[...] - col_sum + pos_cross
            # Exact divide: only tm values per i-tile; the approx EUP
            # reciprocal isn't worth the error when `negative` is small.
            out_ref[...] = positive / negative

    if p_resident:
        p_spec = pl.BlockSpec((B, D), lambda i, k: (0, 0))   # fetched once, VMEM-resident
    else:
        p_spec = pl.BlockSpec((B, tk), lambda i, k: (0, k))  # streamed per k-chunk

    grid_spec = pltpu.PrefetchScalarGridSpec(
        num_scalar_prefetch=0,
        grid=(num_i, num_k),
        in_specs=[
            pl.BlockSpec((tk, tm), lambda i, k: (k, i)),     # q^T tile (f32)
            p_spec,                                          # p (bf16)
            pl.BlockSpec((tk, tm), lambda i, k: (k, i)),     # p^T tile (f32, diag path)
            pl.BlockSpec((B, tm), lambda i, k: (0, i)),      # labels^T columns (bf16)
            pl.BlockSpec((1, tm), lambda i, k: (0, i)),      # pos_base = h + L@h
            pl.BlockSpec((1, tm), lambda i, k: (0, i)),      # neg_base = H - L@h
        ],
        out_specs=pl.BlockSpec((1, tm), lambda i, k: (0, i)),
        scratch_shapes=[
            pltpu.VMEM((B, tm), jnp.float32),   # cross^T accumulator
            pltpu.VMEM((1, tm), jnp.float32),   # f32 self-KL accumulator
        ],
    )

    cp_kwargs = dict(dimension_semantics=("parallel", "arbitrary"))
    if est_vmem > 12 * 1024 * 1024:
        # Raise the scoped VMEM limit only when the working set needs it
        # (stays within v7x's 64 MiB physical VMEM).
        cp_kwargs["vmem_limit_bytes"] = 64 * 1024 * 1024

    ratios = pl.pallas_call(
        kernel,
        out_shape=jax.ShapeDtypeStruct((1, B), jnp.float32),
        grid_spec=grid_spec,
        compiler_params=pltpu.CompilerParams(**cp_kwargs),
    )(q_t, p_bf, p_t, lbl_t, pos_base, neg_base)

    return jnp.sum(ratios)


def _reference(q, p, labels_matrix):
    # Direct (non-matmul) f32 re-statement of the PyTorch forward, for checking.
    log_q = jnp.log(q)
    log_p = jnp.log(p)
    kl_div = jnp.mean(p * (log_p - log_q), axis=1)
    kl_dis = jnp.mean(
        p[None, :, :] * (log_p[None, :, :] - log_q[:, None, :]), axis=2)
    positive = kl_div + jnp.sum(kl_dis * labels_matrix, axis=1)
    negative = jnp.sum(kl_dis * (1.0 - labels_matrix), axis=1)
    return jnp.sum(positive / negative)


if __name__ == "__main__":
    B, D = 8, 128
    key = jax.random.PRNGKey(0)
    kq, kp = jax.random.split(key, 2)
    # q, p are valid probability distributions along dim=1 (as the module expects).
    q = jax.nn.softmax(jax.random.normal(kq, (B, D), jnp.float32), axis=1)
    p = jax.nn.softmax(jax.random.normal(kp, (B, D), jnp.float32), axis=1)
    # Deterministic label matrix (3 classes) -> every row has >= 1 negative.
    labels = jnp.arange(B) % 3
    labels_matrix = (labels[:, None] == labels[None, :]).astype(jnp.float32)

    loss = distribution_loss_with_label_v2(q, p, labels_matrix)
    jax.block_until_ready(loss)

    ref = _reference(q, p, labels_matrix)
    # Tolerance covers the bf16 MXU cross term (f32 accumulation); the
    # self-KL diagonal, entropy bases and final divide are all f32-exact.
    assert jnp.allclose(loss, ref, rtol=2e-2, atol=1e-2), (loss, ref)
    print("KERNEL_OK")
</pallas_src>

<mosaic_0001>
module attributes {stable_mosaic.version = 11 : i64} {
  func.func @kernel(%arg0: i32, %arg1: i32, %arg2: memref<128x8xf32, #tpu.memory_space<vmem>>, %arg3: memref<8x128xbf16, #tpu.memory_space<vmem>>, %arg4: memref<128x8xf32, #tpu.memory_space<vmem>>, %arg5: memref<8x8xbf16, #tpu.memory_space<vmem>>, %arg6: memref<1x8xf32, #tpu.memory_space<vmem>>, %arg7: memref<1x8xf32, #tpu.memory_space<vmem>>, %arg8: memref<1x8xf32, #tpu.memory_space<vmem>>, %arg9: memref<8x8xf32, #tpu.memory_space<vmem>>, %arg10: memref<1x8xf32, #tpu.memory_space<vmem>>) attributes {dimension_semantics = [#tpu.dimension_semantics<parallel>, #tpu.dimension_semantics<arbitrary>], iteration_bounds = array<i64: 1, 1>, scalar_prefetch = 0 : i64, scratch_operands = 2 : i64, tpu.core_type = #tpu.core_type<tc>, window_params = [{transform_indices = @transform_0, window_bounds = array<i64: 128, 8>}, {pipeline_mode = #tpu.pipeline_mode<synchronous>, transform_indices = @transform_1, window_bounds = array<i64: 8, 128>}, {transform_indices = @transform_2, window_bounds = array<i64: 128, 8>}, {transform_indices = @transform_3, window_bounds = array<i64: 8, 8>}, {transform_indices = @transform_4, window_bounds = array<i64: 1, 8>}, {transform_indices = @transform_5, window_bounds = array<i64: 1, 8>}, {transform_indices = @transform_6, window_bounds = array<i64: 1, 8>}]} {
    %c0_i32 = arith.constant 0 : i32
    %0 = arith.cmpi eq, %arg1, %c0_i32 : i32
    %1 = arith.extui %0 : i1 to i32
    %c0_i32_0 = arith.constant 0 : i32
    %2 = arith.cmpi ne, %1, %c0_i32_0 : i32
    scf.if %2 {
      %cst_17 = arith.constant 0.000000e+00 : f32
      %21 = vector.broadcast %cst_17 : f32 to vector<8x8xf32>
      %c0_18 = arith.constant 0 : index
      %c0_19 = arith.constant 0 : index
      %22 = vector.load %arg9[%c0_18, %c0_19] : memref<8x8xf32, #tpu.memory_space<vmem>>, vector<8x8xf32>
      tpu.vector_store %arg9[%c0_18, %c0_19], %21 {strides = array<i32>} : memref<8x8xf32, #tpu.memory_space<vmem>>, vector<8x8xf32>,
      %cst_20 = arith.constant 0.000000e+00 : f32
      %23 = vector.broadcast %cst_20 : f32 to vector<1x8xf32>
      %c0_21 = arith.constant 0 : index
      %c0_22 = arith.constant 0 : index
      %24 = vector.load %arg10[%c0_21, %c0_22] : memref<1x8xf32, #tpu.memory_space<vmem>>, vector<1x8xf32>
      tpu.vector_store %arg10[%c0_21, %c0_22], %23 {strides = array<i32>} : memref<1x8xf32, #tpu.memory_space<vmem>>, vector<1x8xf32>,
    } else {
    }
    %c0 = arith.constant 0 : index
    %c0_1 = arith.constant 0 : index
    %3 = vector.load %arg2[%c0, %c0_1] : memref<128x8xf32, #tpu.memory_space<vmem>>, vector<128x8xf32>
    %4 = math.log %3 : vector<128x8xf32>
    %c0_2 = arith.constant 0 : index
    %c0_3 = arith.constant 0 : index
    %5 = vector.load %arg3[%c0_2, %c0_3] : memref<8x128xbf16, #tpu.memory_space<vmem>>, vector<8x128xbf16>
    %c0_4 = arith.constant 0 : index
    %c0_5 = arith.constant 0 : index
    %6 = vector.load %arg9[%c0_4, %c0_5] : memref<8x8xf32, #tpu.memory_space<vmem>>, vector<8x8xf32>
    %7 = arith.truncf %4 : vector<128x8xf32> to vector<128x8xbf16>
    %cst = arith.constant dense<0.000000e+00> : vector<8x8xf32>
    %8 = tpu.matmul %5, %7, %cst {dimension_numbers = #tpu.dot_dimension_numbers<[1], [0], [0], [1], [0, 0, 1, 1], [], []>} : vector<8x128xbf16>, vector<128x8xbf16>, vector<8x8xf32> -> vector<8x8xf32>
    %9 = arith.addf %6, %8 : vector<8x8xf32>
    %c0_6 = arith.constant 0 : index
    %c0_7 = arith.constant 0 : index
    %10 = vector.load %arg9[%c0_6, %c0_7] : memref<8x8xf32, #tpu.memory_space<vmem>>, vector<8x8xf32>
    tpu.vector_store %arg9[%c0_6, %c0_7], %9 {strides = array<i32>} : memref<8x8xf32, #tpu.memory_space<vmem>>, vector<8x8xf32>,
    %c0_8 = arith.constant 0 : index
    %c0_9 = arith.constant 0 : index
    %11 = vector.load %arg10[%c0_8, %c0_9] : memref<1x8xf32, #tpu.memory_space<vmem>>, vector<1x8xf32>
    %c0_10 = arith.constant 0 : index
    %c0_11 = arith.constant 0 : index
    %12 = vector.load %arg4[%c0_10, %c0_11] : memref<128x8xf32, #tpu.memory_space<vmem>>, vector<128x8xf32>
    %13 = arith.mulf %12, %4 : vector<128x8xf32>
    %cst_12 = arith.constant dense<0.000000e+00> : vector<8xf32>
    %14 = vector.multi_reduction <add>, %13, %cst_12 [0] : vector<128x8xf32> to vector<8xf32>
    %15 = vector.shape_cast %14 : vector<8xf32> to vector<1x8xf32>
    %16 = arith.addf %11, %15 : vector<1x8xf32>
    %c0_13 = arith.constant 0 : index
    %c0_14 = arith.constant 0 : index
    %17 = vector.load %arg10[%c0_13, %c0_14] : memref<1x8xf32, #tpu.memory_space<vmem>>, vector<1x8xf32>
    tpu.vector_store %arg10[%c0_13, %c0_14], %16 {strides = array<i32>} : memref<1x8xf32, #tpu.memory_space<vmem>>, vector<1x8xf32>,
    %c0_i32_15 = arith.constant 0 : i32
    %18 = arith.cmpi eq, %arg1, %c0_i32_15 : i32
    %19 = arith.extui %18 : i1 to i32
    %c0_i32_16 = arith.constant 0 : i32
    %20 = arith.cmpi ne, %19, %c0_i32_16 : i32
    scf.if %20 {
      %c0_17 = arith.constant 0 : index
      %c0_18 = arith.constant 0 : index
      %21 = vector.load %arg5[%c0_17, %c0_18] : memref<8x8xbf16, #tpu.memory_space<vmem>>, vector<8x8xbf16>
      %22 = arith.extf %21 : vector<8x8xbf16> to vector<8x8xf32>
      %c0_19 = arith.constant 0 : index
      %c0_20 = arith.constant 0 : index
      %23 = vector.load %arg9[%c0_19, %c0_20] : memref<8x8xf32, #tpu.memory_space<vmem>>, vector<8x8xf32>
      %cst_21 = arith.constant dense<0.000000e+00> : vector<8xf32>
      %24 = vector.multi_reduction <add>, %23, %cst_21 [0] : vector<8x8xf32> to vector<8xf32>
      %25 = vector.shape_cast %24 : vector<8xf32> to vector<1x8xf32>
      %26 = arith.mulf %23, %22 : vector<8x8xf32>
      %cst_22 = arith.constant dense<0.000000e+00> : vector<8xf32>
      %27 = vector.multi_reduction <add>, %26, %cst_22 [0] : vector<8x8xf32> to vector<8xf32>
      %28 = vector.shape_cast %27 : vector<8xf32> to vector<1x8xf32>
      %c0_23 = arith.constant 0 : index
      %c0_24 = arith.constant 0 : index
      %29 = vector.load %arg6[%c0_23, %c0_24] : memref<1x8xf32, #tpu.memory_space<vmem>>, vector<1x8xf32>
      %c0_25 = arith.constant 0 : index
      %c0_26 = arith.constant 0 : index
      %30 = vector.load %arg10[%c0_25, %c0_26] : memref<1x8xf32, #tpu.memory_space<vmem>>, vector<1x8xf32>
      %31 = arith.subf %29, %30 : vector<1x8xf32>
      %32 = arith.subf %31, %28 : vector<1x8xf32>
      %c0_27 = arith.constant 0 : index
      %c0_28 = arith.constant 0 : index
      %33 = vector.load %arg7[%c0_27, %c0_28] : memref<1x8xf32, #tpu.memory_space<vmem>>, vector<1x8xf32>
      %34 = arith.subf %33, %25 : vector<1x8xf32>
      %35 = arith.addf %34, %28 : vector<1x8xf32>
      %36 = arith.divf %32, %35 : vector<1x8xf32>
      %c0_29 = arith.constant 0 : index
      %c0_30 = arith.constant 0 : index
      %37 = vector.load %arg8[%c0_29, %c0_30] : memref<1x8xf32, #tpu.memory_space<vmem>>, vector<1x8xf32>
      tpu.vector_store %arg8[%c0_29, %c0_30], %36 {strides = array<i32>} : memref<1x8xf32, #tpu.memory_space<vmem>>, vector<1x8xf32>,
    } else {
    }
    return
  }
  func.func @transform_0(%arg0: i32, %arg1: i32) -> (i32, i32) {
    %c0_i32 = arith.constant 0 : i32
    return %arg1, %arg0 : i32, i32
  }
  func.func @transform_1(%arg0: i32, %arg1: i32) -> (i32, i32) {
    %c0_i32 = arith.constant 0 : i32
    %c0_i32_0 = arith.constant 0 : i32
    %c0_i32_1 = arith.constant 0 : i32
    return %c0_i32, %c0_i32_0 : i32, i32
  }
  func.func @transform_2(%arg0: i32, %arg1: i32) -> (i32, i32) {
    %c0_i32 = arith.constant 0 : i32
    return %arg1, %arg0 : i32, i32
  }
  func.func @transform_3(%arg0: i32, %arg1: i32) -> (i32, i32) {
    %c0_i32 = arith.constant 0 : i32
    %c0_i32_0 = arith.constant 0 : i32
    return %c0_i32, %arg0 : i32, i32
  }
  func.func @transform_4(%arg0: i32, %arg1: i32) -> (i32, i32) {
    %c0_i32 = arith.constant 0 : i32
    %c0_i32_0 = arith.constant 0 : i32
    return %c0_i32, %arg0 : i32, i32
  }
  func.func @transform_5(%arg0: i32, %arg1: i32) -> (i32, i32) {
    %c0_i32 = arith.constant 0 : i32
    %c0_i32_0 = arith.constant 0 : i32
    return %c0_i32, %arg0 : i32, i32
  }
  func.func @transform_6(%arg0: i32, %arg1: i32) -> (i32, i32) {
    %c0_i32 = arith.constant 0 : i32
    %c0_i32_0 = arith.constant 0 : i32
    return %c0_i32, %arg0 : i32, i32
  }
}

</mosaic_0001>

<llo_original>
// kernel: tpu_custom_call.1
$region0: #{tpu_custom_call.1}
  #allocation0 [shape = 'u32[]', space=smem, size = 0x4, offset = 0x4, fixed_abs, tag = 'smem constant byte address 0x4 - core index']
  #allocation1 [shape = 'u32[144,128]{1,0:T(1,128)}', space=vmem, size = 0x12000, scoped, tag = 'internal scratch']
  #allocation2 [shape = 'f32[8,8]{1,0:T(8,128)}', space=vmem, size = 0x1000, scoped, tag = 'scratch operand']
  #allocation3 [shape = 'f32[1,8]{1,0:T(1,128)}', space=vmem, size = 0x200, scoped, tag = 'scratch operand']
  %s0 = inlined_call_operand.vmem [shape: f32[128,8], index: 0, kind: input, shape index: {}]
  %s1 = inlined_call_operand.vmem [shape: bf16[8,128], index: 1, kind: input, shape index: {}]
  %s2 = inlined_call_operand.vmem [shape: f32[128,8], index: 2, kind: input, shape index: {}]
  %s3 = inlined_call_operand.vmem [shape: bf16[8,8], index: 3, kind: input, shape index: {}]
  %s4 = inlined_call_operand.vmem [shape: f32[1,8], index: 4, kind: input, shape index: {}]
  %s5 = inlined_call_operand.vmem [shape: f32[1,8], index: 5, kind: input, shape index: {}]
  %s6 = inlined_call_operand.hbm [shape: f32[1,8], index: 6, kind: output, shape index: {}]
  %s7 = sld [smem:[#allocation0]]
  $region42: #{tpu_custom_call.1} parent=0
    _
  %s9 = ssub.s32 1, %s7
  %s10 = scalar_select 0, %s9, %s7
  $region1: #{tpu_custom_call.1} parent=0
    #allocation4 [shape = 'u8[512]{0}', space=vmem, size = 0x400, scoped, tag = 'output window, operand 0, single buffered']
    #allocation5 [shape = 's32[1]{0}', space=sflag, size = 0x4, scoped, tag = 'scoped memory for tpu_custom_call.1']
    %11 = vsyncpa [#allocation5], 0
    // Predicated region
    $region2: #{tpu_custom_call.1} parent=1 // pred_check
      _
    $region3: #{tpu_custom_call.1} parent=1 // pred_check_branch
      %13 = sbr.rel (0) target = $region5
    $region4: #{tpu_custom_call.1} parent=1 // pred_region
      _
    $region5: #{tpu_custom_call.1} parent=1 // pred_fallthru
      _
    // Predicated region
    $region6: #{tpu_custom_call.1} parent=1 // pred_check
      _
    $region7: #{tpu_custom_call.1} parent=1 // pred_check_branch
      %15 = sbr.rel (0) target = $region9
    $region8: #{tpu_custom_call.1} parent=1 // pred_region
      _
    $region9: #{tpu_custom_call.1} parent=1 // pred_fallthru
      _
    // Predicated region
    $region10: #{tpu_custom_call.1} parent=1 // pred_check
      _
    $region11: #{tpu_custom_call.1} parent=1 // pred_check_branch
      %17 = sbr.rel (0) target = $region13
    $region12: #{tpu_custom_call.1} parent=1 // pred_region
      _
    $region13: #{tpu_custom_call.1} parent=1 // pred_fallthru
      _
    // Predicated region
    $region14: #{tpu_custom_call.1} parent=1 // pred_check
      _
    $region15: #{tpu_custom_call.1} parent=1 // pred_check_branch
      %19 = sbr.rel (0) target = $region17
    $region16: #{tpu_custom_call.1} parent=1 // pred_region
      _
    $region17: #{tpu_custom_call.1} parent=1 // pred_fallthru
      _
    // Predicated region
    $region18: #{tpu_custom_call.1} parent=1 // pred_check
      _
    $region19: #{tpu_custom_call.1} parent=1 // pred_check_branch
      %21 = sbr.rel (0) target = $region21
    $region20: #{tpu_custom_call.1} parent=1 // pred_region
      _
    $region21: #{tpu_custom_call.1} parent=1 // pred_fallthru
      _
    // Predicated region
    $region22: #{tpu_custom_call.1} parent=1 // pred_check
      _
    $region23: #{tpu_custom_call.1} parent=1 // pred_check_branch
      %23 = sbr.rel (0) target = $region25
    $region24: #{tpu_custom_call.1} parent=1 // pred_region
      _
    $region25: #{tpu_custom_call.1} parent=1 // pred_fallthru
      _
    %p25 = scmp.eq.s32.totalorder 0, 0
    // Predicated region
    $region26: #{tpu_custom_call.1} parent=1 // pred_check
      %p26 = pneg %p25
    $region27: #{tpu_custom_call.1} parent=1 // pred_check_branch
      %28 = sbr.rel (%p26) target = $region29
    $region28: #{tpu_custom_call.1} parent=1 // pred_region
      %vm29 = vcmask 64512
      %30 = vst.msk [vmem:[#allocation2] sm:$0xff] %vm29, 0.0
      %vm31 = vcmask 57344
      %32 = vst.msk [vmem:[#allocation3] sm:$0x1] %vm31, 0.0
    $region29: #{tpu_custom_call.1} parent=1 // pred_fallthru
      _
    %v33 = vld [vmem:[%s0] sm:$0xff]
    %v34 = vld [vmem:[%s0 + $0x8] sm:$0xff]
    %v35 = vld [vmem:[%s0 + $0x10] sm:$0xff]
    %v36 = vld [vmem:[%s0 + $0x18] sm:$0xff]
    %v37 = vld [vmem:[%s0 + $0x20] sm:$0xff]
    %v38 = vld [vmem:[%s0 + $0x28] sm:$0xff]
    %v39 = vld [vmem:[%s0 + $0x30] sm:$0xff]
    %v40 = vld [vmem:[%s0 + $0x38] sm:$0xff]
    %v41 = vld [vmem:[%s0 + $0x40] sm:$0xff]
    %v42 = vld [vmem:[%s0 + $0x48] sm:$0xff]
    %v43 = vld [vmem:[%s0 + $0x50] sm:$0xff]
    %v44 = vld [vmem:[%s0 + $0x58] sm:$0xff]
    %v45 = vld [vmem:[%s0 + $0x60] sm:$0xff]
    %v46 = vld [vmem:[%s0 + $0x68] sm:$0xff]
    %v47 = vld [vmem:[%s0 + $0x70] sm:$0xff]
    %v48 = vld [vmem:[%s0 + $0x78] sm:$0xff]
    %v49 = vlog2.pop %v33
    %v50 = vmul.f32 %v49, 0.6931472
    %v51 = vlog2.pop %v34
    %v52 = vmul.f32 %v51, 0.6931472
    %v53 = vlog2.pop %v35
    %v54 = vmul.f32 %v53, 0.6931472
    %v55 = vlog2.pop %v36
    %v56 = vmul.f32 %v55, 0.6931472
    %v57 = vlog2.pop %v37
    %v58 = vmul.f32 %v57, 0.6931472
    %v59 = vlog2.pop %v38
    %v60 = vmul.f32 %v59, 0.6931472
    %v61 = vlog2.pop %v39
    %v62 = vmul.f32 %v61, 0.6931472
    %v63 = vlog2.pop %v40
    %v64 = vmul.f32 %v63, 0.6931472
    %v65 = vlog2.pop %v41
    %v66 = vmul.f32 %v65, 0.6931472
    %v67 = vlog2.pop %v42
    %v68 = vmul.f32 %v67, 0.6931472
    %v69 = vlog2.pop %v43
    %v70 = vmul.f32 %v69, 0.6931472
    %v71 = vlog2.pop %v44
    %v72 = vmul.f32 %v71, 0.6931472
    %v73 = vlog2.pop %v45
    %v74 = vmul.f32 %v73, 0.6931472
    %v75 = vlog2.pop %v46
    %v76 = vmul.f32 %v75, 0.6931472
    %v77 = vlog2.pop %v47
    %v78 = vmul.f32 %v77, 0.6931472
    %v79 = vlog2.pop %v48
    %v80 = vmul.f32 %v79, 0.6931472
    %v81 = vld [vmem:[%s1] sm:$0xf]
    %v82 = vld [vmem:[#allocation2] sm:$0xff]
    %v83 = vpack.c.bf16 %v52, %v50
    %v84 = vpack.c.bf16 %v56, %v54
    %v85 = vpack.c.bf16 %v60, %v58
    %v86 = vpack.c.bf16 %v64, %v62
    %v87 = vpack.c.bf16 %v68, %v66
    %v88 = vpack.c.bf16 %v72, %v70
    %v89 = vpack.c.bf16 %v76, %v74
    %v90 = vpack.c.bf16 %v80, %v78
    %91 = vmatprep.subr.bf16.mxu0 0
    %92 = vmatpush1.bf16.msra.mxu0 %v83
    %93 = vmatprep.subr.bf16.mxu0 0
    %94 = vmatpush1.bf16.msra.mxu0 %v84
    %95 = vmatprep.subr.bf16.mxu0 0
    %96 = vmatpush1.bf16.msra.mxu0 %v85
    %97 = vmatprep.subr.bf16.mxu0 0
    %98 = vmatpush1.bf16.msra.mxu0 %v86
    %99 = vmatprep.subr.bf16.mxu0 0
    %100 = vmatpush1.bf16.msra.mxu0 %v87
    %101 = vmatprep.subr.bf16.mxu0 0
    %102 = vmatpush1.bf16.msra.mxu0 %v88
    %103 = vmatprep.subr.bf16.mxu0 0
    %104 = vmatpush1.bf16.msra.mxu0 %v89
    %105 = vmatprep.subr.bf16.mxu0 0
    %106 = vmatpush1.bf16.msra.mxu0 %v90
    %107 = vmatprep.subr.bf16.mxu0 0
    %108 = vmatpush1.bf16.msra.mxu0 0
    %109 = vmatprep.subr.bf16.mxu0 0
    %110 = vmatpush1.bf16.msra.mxu0 0
    %111 = vmatprep.subr.bf16.mxu0 0
    %112 = vmatpush1.bf16.msra.mxu0 0
    %113 = vmatprep.subr.bf16.mxu0 0
    %114 = vmatpush1.bf16.msra.mxu0 0
    %115 = vmatprep.subr.bf16.mxu0 0
    %116 = vmatpush1.bf16.msra.mxu0 0
    %117 = vmatprep.subr.bf16.mxu0 0
    %118 = vmatpush1.bf16.msra.mxu0 0
    %119 = vmatprep.subr.bf16.mxu0 0
    %120 = vmatpush1.bf16.msra.mxu0 0
    %121 = vmatprep.subr.bf16.mxu0 0
    %122 = vmatpush1.bf16.msra.mxu0 0
    %123 = vmatprep.mubr.bf16.mxu0 0
    %124 = vmatmul.mubr.bf16.gmra.mrb[0].mxu0 %v81
    %v125 = vpop.f32.mrb[0].mxu0
    %v126 = vadd.f32 0.0, %v125
    %v127 = vpop.f32.mrb[0].mxu0
    %v128 = vpop.f32.mrb[0].mxu0
    %v129 = vpop.f32.mrb[0].mxu0
    %130 = vdwg.mxu0
    %v131 = vadd.f32 %v82, %v126
    %vm132 = vcmask 64512
    %133 = vst.msk [vmem:[#allocation2] sm:$0xff] %vm132, %v131
    %v134 = vld [vmem:[#allocation3] sm:$0x1]
    %v135 = vld [vmem:[%s2] sm:$0xff]
    %v136 = vld [vmem:[%s2 + $0x8] sm:$0xff]
    %v137 = vld [vmem:[%s2 + $0x10] sm:$0xff]
    %v138 = vld [vmem:[%s2 + $0x18] sm:$0xff]
    %v139 = vld [vmem:[%s2 + $0x20] sm:$0xff]
    %v140 = vld [vmem:[%s2 + $0x28] sm:$0xff]
    %v141 = vld [vmem:[%s2 + $0x30] sm:$0xff]
    %v142 = vld [vmem:[%s2 + $0x38] sm:$0xff]
    %v143 = vld [vmem:[%s2 + $0x40] sm:$0xff]
    %v144 = vld [vmem:[%s2 + $0x48] sm:$0xff]
    %v145 = vld [vmem:[%s2 + $0x50] sm:$0xff]
    %v146 = vld [vmem:[%s2 + $0x58] sm:$0xff]
    %v147 = vld [vmem:[%s2 + $0x60] sm:$0xff]
    %v148 = vld [vmem:[%s2 + $0x68] sm:$0xff]
    %v149 = vld [vmem:[%s2 + $0x70] sm:$0xff]
    %v150 = vld [vmem:[%s2 + $0x78] sm:$0xff]
    %v151 = vmul.f32 %v135, %v50
    %v152 = vmul.f32 %v136, %v52
    %v153 = vmul.f32 %v137, %v54
    %v154 = vmul.f32 %v138, %v56
    %v155 = vmul.f32 %v139, %v58
    %v156 = vmul.f32 %v140, %v60
    %v157 = vmul.f32 %v141, %v62
    %v158 = vmul.f32 %v142, %v64
    %v159 = vmul.f32 %v143, %v66
    %v160 = vmul.f32 %v144, %v68
    %v161 = vmul.f32 %v145, %v70
    %v162 = vmul.f32 %v146, %v72
    %v163 = vmul.f32 %v147, %v74
    %v164 = vmul.f32 %v148, %v76
    %v165 = vmul.f32 %v149, %v78
    %v166 = vmul.f32 %v150, %v80
    %v167 = vsel %vm132, %v151, 0.0
    %v168 = vsel %vm132, %v152, 0.0
    %v169 = vadd.f32 %v167, %v168
    %v170 = vsel %vm132, %v153, 0.0
    %v171 = vadd.f32 %v169, %v170
    %v172 = vsel %vm132, %v154, 0.0
    %v173 = vadd.f32 %v171, %v172
    %v174 = vsel %vm132, %v155, 0.0
    %v175 = vadd.f32 %v173, %v174
    %v176 = vsel %vm132, %v156, 0.0
    %v177 = vadd.f32 %v175, %v176
    %v178 = vsel %vm132, %v157, 0.0
    %v179 = vadd.f32 %v177, %v178
    %v180 = vsel %vm132, %v158, 0.0
    %v181 = vadd.f32 %v179, %v180
    %v182 = vsel %vm132, %v159, 0.0
    %v183 = vadd.f32 %v181, %v182
    %v184 = vsel %vm132, %v160, 0.0
    %v185 = vadd.f32 %v183, %v184
    %v186 = vsel %vm132, %v161, 0.0
    %v187 = vadd.f32 %v185, %v186
    %v188 = vsel %vm132, %v162, 0.0
    %v189 = vadd.f32 %v187, %v188
    %v190 = vsel %vm132, %v163, 0.0
    %v191 = vadd.f32 %v189, %v190
    %v192 = vsel %vm132, %v164, 0.0
    %v193 = vadd.f32 %v191, %v192
    %v194 = vsel %vm132, %v165, 0.0
    %v195 = vadd.f32 %v193, %v194
    %v196 = vsel %vm132, %v166, 0.0
    %v197 = vadd.f32 %v195, %v196
    %v198 = vrot.slane %v197, 4
    %v199 = vadd.f32 %v197, %v198
    %v200 = vrot.slane %v199, 2
    %v201 = vadd.f32 %v199, %v200
    %v202 = vrot.slane %v201, 1
    %v203 = vadd.f32 %v201, %v202
    %v204 = vadd.f32 %v134, %v203
    %vm205 = vcmask 57344
    %206 = vst.msk [vmem:[#allocation3] sm:$0x1] %vm205, %v204
    // Predicated region
    $region30: #{tpu_custom_call.1} parent=1 // pred_check
      %p207 = pneg %p25
    $region31: #{tpu_custom_call.1} parent=1 // pred_check_branch
      %209 = sbr.rel (%p207) target = $region33
    $region32: #{tpu_custom_call.1} parent=1 // pred_region
      %v210 = vld [vmem:[%s3] sm:$0xf]
      %v211 = vunpack.c.l.bf16 %v210
      %v212 = vld [vmem:[#allocation2] sm:$0xff]
      %v213 = vsel %vm132, %v212, 0.0
      %v214 = vrot.slane %v213, 4
      %v215 = vadd.f32 %v213, %v214
      %v216 = vrot.slane %v215, 2
      %v217 = vadd.f32 %v215, %v216
      %v218 = vrot.slane %v217, 1
      %v219 = vadd.f32 %v217, %v218
      %v220 = vmul.f32 %v212, %v211
      %v221 = vsel %vm132, %v220, 0.0
      %v222 = vrot.slane %v221, 4
      %v223 = vadd.f32 %v221, %v222
      %v224 = vrot.slane %v223, 2
      %v225 = vadd.f32 %v223, %v224
      %v226 = vrot.slane %v225, 1
      %v227 = vadd.f32 %v225, %v226
      %v228 = vld [vmem:[%s4] sm:$0x1]
      %v229 = vld [vmem:[#allocation3] sm:$0x1]
      %v230 = vsub.f32 %v228, %v229
      %v231 = vsub.f32 %v230, %v227
      %v232 = vld [vmem:[%s5] sm:$0x1]
      %v233 = vsub.f32 %v232, %v219
      %v234 = vadd.f32 %v233, %v227
      %v235 = vrcp.pop %v234
      %v236 = vmul.f32 %v231, %v235
      %237 = vst.msk [vmem:[#allocation4] sm:$0x1] %vm205, %v236
    $region33: #{tpu_custom_call.1} parent=1 // pred_fallthru
      _
    // Predicated region
    $region34: #{tpu_custom_call.1} parent=1 // pred_check
      _
    $region35: #{tpu_custom_call.1} parent=1 // pred_check_branch
      %239 = sbr.rel (0) target = $region37
    $region36: #{tpu_custom_call.1} parent=1 // pred_region
      %s241 = ssub.s32 16, 16
      %242 = vsyncadd [#allocation5], %s241
      %s244 = sshll.u32 [#allocation4], 4
      %s245 = int_to_ptr.vmem [resolvable:$true] %s244
      %247 = dma.vmem_to_hbm [thread:$0]  %s245, 16, %s6, [#allocation5]
    $region37: #{tpu_custom_call.1} parent=1 // pred_fallthru
      _
    // Predicated region
    $region38: #{tpu_custom_call.1} parent=1 // pred_check
      _
    $region39: #{tpu_custom_call.1} parent=1 // pred_check_branch
      %249 = sbr.rel (0) target = $region41
    $region40: #{tpu_custom_call.1} parent=1 // pred_region
      %250 = dma.done [#allocation5], 16
    $region41: #{tpu_custom_call.1} parent=1 // pred_fallthru
      _
    %251 = vsyncpa [#allocation5], 1

</llo_original>
